<compile_context>
chip_gen: v7x
topology: tpu7x:2x2x1
jax: 0.10.0
libtpu: 0.0.40
codegen_flags: <defaults>
</compile_context>

<pallas_src>
import math

import jax
import jax.numpy as jnp
import numpy as np
from jax.experimental import pallas as pl
from jax.experimental.pallas import tpu as pltpu


def _rope1d_kernel(x_ref, cos_ref, ssin_ref, o_ref):
    """One (TS, DL) tile: out = x*cos + ssin * pair_swap(x).

    ssin holds -sin(angle) on even lanes and +sin(angle) on odd lanes, so
      even lane 2k   : x[2k]*cos - x[2k+1]*sin
      odd  lane 2k+1 : x[2k+1]*cos + x[2k]*sin
    The pair swap is built from two XLU rolls gated by lane parity; the roll
    wrap-around lanes (j=0 / j=DL-1) are never selected by the parity mask.
    """
    x = x_ref[...].astype(jnp.float32)
    lane_axis = x.ndim - 1
    n = x.shape[lane_axis]
    # pltpu.roll follows jnp.roll semantics: out[j] = x[(j - shift) % n].
    x_next = pltpu.roll(x, shift=n - 1, axis=lane_axis)   # x[(j + 1) % n]
    x_prev = pltpu.roll(x, shift=1, axis=lane_axis)       # x[(j - 1) % n]
    lane = jax.lax.broadcasted_iota(jnp.int32, x.shape, lane_axis)
    partner = jnp.where((lane & 1) == 0, x_next, x_prev)  # == x[j ^ 1]
    out = x * cos_ref[...].astype(jnp.float32) + ssin_ref[...].astype(jnp.float32) * partner
    o_ref[...] = out.astype(o_ref.dtype)


def _rotation_tables(seq_len, feature_dim, reverse, base):
    """Host-side float64 build of cos / sign-baked sin tables, shape (S, D)."""
    k_max = feature_dim // 2
    theta = 1.0 / (float(base) ** (np.arange(k_max, dtype=np.float64) / k_max))
    if reverse:
        # torch.flip over the full (base,) table then taking the last S rows
        # == angle (S-1-p) * theta at position p.
        pos = np.arange(seq_len - 1, -1, -1, dtype=np.float64)
    else:
        pos = np.arange(seq_len, dtype=np.float64)
    ang = pos[:, None] * theta[None, :]                               # (S, k_max)
    cos_full = np.repeat(np.cos(ang), 2, axis=-1)                     # (S, D)
    sin = np.sin(ang)
    ssin = np.stack([-sin, sin], axis=-1).reshape(seq_len, feature_dim)
    return cos_full, ssin                                             # float64 numpy


def _pick_row_tile(rows, lane_dim, itemsize, n_batch):
    """Row tile: multiple of the sublane tile, ~1 MiB of x per tile.

    The tile does NOT have to divide `rows` (grid uses pl.cdiv; Pallas masks
    the ragged last block), so VMEM use is bounded regardless of S.
    """
    sub = 8 if itemsize >= 4 else (16 if itemsize == 2 else 32)
    if rows <= sub:
        return rows                               # full extent -> always legal
    target_rows = max(sub, (1 << 20) // (lane_dim * itemsize))   # ~1 MiB of x
    t = max(sub, (min(target_rows, rows) // sub) * sub)
    if n_batch == 1:
        # v7x has 2 TensorCores sharded over the parallel grid axes: make sure
        # there are at least 2 grid points when the batch axis can't provide them.
        t = min(t, max(sub, ((rows // 2) // sub) * sub))
    return t


def rope1d(x, reverse=False, base=10000):
    """RoPE1d forward matching the PyTorch module. x: (B, S, D), D even."""
    B, S, D = x.shape
    assert D % 2 == 0, "feature_dim must be even"

    # ---- lane-dense folding: make the last dim a multiple of 128.
    fold = 1 if D % 128 == 0 else 128 // math.gcd(D, 128)
    pad = (-S) % fold
    S_p = S + pad

    cos_np, ssin_np = _rotation_tables(S, D, reverse, base)
    if pad:
        # Pad the sequence so the fold reshape stays a contiguous (free) merge
        # and every store remains a full-lane vst; padded rows sliced off below.
        x = jnp.pad(x, ((0, 0), (0, pad), (0, 0)))
        cos_np = np.pad(cos_np, ((0, pad), (0, 0)))
        ssin_np = np.pad(ssin_np, ((0, pad), (0, 0)))

    rows = S_p // fold
    DL = D * fold

    # Tables matched to the activation dtype (halves table traffic for bf16 x);
    # the kernel up-casts to f32 before the FMAs.
    x_dt = jnp.dtype(x.dtype)
    table_dtype = x.dtype if (jnp.issubdtype(x.dtype, jnp.floating) and x_dt.itemsize <= 4) else jnp.float32
    cos_t = jnp.asarray(cos_np.reshape(rows, DL), table_dtype)
    ssin_t = jnp.asarray(ssin_np.reshape(rows, DL), table_dtype)

    # Contiguous reshape: (real, imag) pairs stay adjacent, never straddle a row.
    x_f = x.reshape(B, rows, DL)

    ts = _pick_row_tile(rows, DL, x_dt.itemsize, B)
    n_s = pl.cdiv(rows, ts)
    # B innermost so the trig-table block index (s, 0) is constant across the
    # inner loop and Pallas skips re-DMAing the tables once per batch element.
    grid = (n_s, B)

    tbl_item = jnp.dtype(table_dtype).itemsize
    cost = pl.CostEstimate(
        flops=3 * B * S_p * D,
        transcendentals=0,
        bytes_accessed=2 * B * rows * DL * x_dt.itemsize + 2 * rows * DL * tbl_item,
    )

    out = pl.pallas_call(
        _rope1d_kernel,
        out_shape=jax.ShapeDtypeStruct((B, rows, DL), x.dtype),
        grid_spec=pltpu.PrefetchScalarGridSpec(
            num_scalar_prefetch=0,
            grid=grid,
            in_specs=[
                pl.BlockSpec((None, ts, DL), lambda s, b: (b, s, 0)),  # x tile
                pl.BlockSpec((ts, DL), lambda s, b: (s, 0)),           # cos
                pl.BlockSpec((ts, DL), lambda s, b: (s, 0)),           # sign-baked sin
            ],
            out_specs=pl.BlockSpec((None, ts, DL), lambda s, b: (b, s, 0)),
        ),
        compiler_params=pltpu.CompilerParams(
            # Every (s, b) tile is independent -> both axes parallel, so v7x's
            # two TensorCores can shard whichever axis has extent >= 2.
            dimension_semantics=("parallel", "parallel"),
        ),
        cost_estimate=cost,
    )(x_f, cos_t, ssin_t)

    out = out.reshape(B, S_p, D)
    if pad:
        out = out[:, :S, :]
    return out


def rope1d_ref(x, reverse=False, base=10000):
    """Pure numpy (float64) reference matching the PyTorch forward exactly."""
    B, S, D = x.shape
    k = D // 2
    theta = 1.0 / (float(base) ** (np.arange(k, dtype=np.float64) / k))
    pos = (np.arange(S)[::-1] if reverse else np.arange(S)).astype(np.float64)
    ang = pos[:, None] * theta[None, :]
    c, s = np.cos(ang), np.sin(ang)
    xr = x[..., 0::2].astype(np.float64)
    xi = x[..., 1::2].astype(np.float64)
    out_r = xr * c - xi * s
    out_i = xr * s + xi * c
    out = np.stack([out_r, out_i], axis=-1).reshape(B, S, D)
    return out.astype(x.dtype)


if __name__ == "__main__":
    key = jax.random.PRNGKey(0)
    k0, k1 = jax.random.split(key)

    # Primary small case implied by the module: batch=2, seq=8, feature_dim=32.
    B, S, D = 2, 8, 32
    x = jax.random.normal(k0, (B, S, D), dtype=jnp.float32)

    out = jax.block_until_ready(rope1d(x, reverse=False))
    np.testing.assert_allclose(np.asarray(out), rope1d_ref(np.asarray(x)),
                               rtol=1e-5, atol=1e-5)

    # reverse=True path.
    out_rev = jax.block_until_ready(rope1d(x, reverse=True))
    np.testing.assert_allclose(np.asarray(out_rev), rope1d_ref(np.asarray(x), reverse=True),
                               rtol=1e-5, atol=1e-5)

    # Exercise the multi-tile / B==1 (>=2 grid points) path once.
    x2 = jax.random.normal(k1, (1, 64, 32), dtype=jnp.float32)
    out2 = jax.block_until_ready(rope1d(x2, reverse=False))
    np.testing.assert_allclose(np.asarray(out2), rope1d_ref(np.asarray(x2)),
                               rtol=1e-5, atol=1e-5)

    print("KERNEL_OK")
</pallas_src>

<mosaic_0001>
module attributes {stable_mosaic.version = 11 : i64} {
  func.func @_rope1d_kernel(%arg0: i32, %arg1: i32, %arg2: memref<1x2x128xf32, #tpu.memory_space<vmem>>, %arg3: memref<2x128xf32, #tpu.memory_space<vmem>>, %arg4: memref<2x128xf32, #tpu.memory_space<vmem>>, %arg5: memref<1x2x128xf32, #tpu.memory_space<vmem>>) attributes {dimension_semantics = [#tpu.dimension_semantics<parallel>, #tpu.dimension_semantics<parallel>], iteration_bounds = array<i64: 1, 2>, scalar_prefetch = 0 : i64, scratch_operands = 0 : i64, tpu.core_type = #tpu.core_type<tc>, window_params = [{transform_indices = @transform_0, window_bounds = array<i64: 1, 2, 128>}, {transform_indices = @transform_1, window_bounds = array<i64: 2, 128>}, {transform_indices = @transform_2, window_bounds = array<i64: 2, 128>}, {transform_indices = @transform_3, window_bounds = array<i64: 1, 2, 128>}]} {
    %c0 = arith.constant 0 : index
    %c0_0 = arith.constant 0 : index
    %c0_1 = arith.constant 0 : index
    %0 = vector.load %arg2[%c0, %c0_0, %c0_1] : memref<1x2x128xf32, #tpu.memory_space<vmem>>, vector<1x2x128xf32>
    %1 = vector.shape_cast %0 : vector<1x2x128xf32> to vector<2x128xf32>
    %c127_i32 = arith.constant 127 : i32
    %2 = tpu.dynamic_rotate %1 by %c127_i32 dim 1 : vector<2x128xf32>, i32 -> vector<2x128xf32>
    %c1_i32 = arith.constant 1 : i32
    %3 = tpu.dynamic_rotate %1 by %c1_i32 dim 1 : vector<2x128xf32>, i32 -> vector<2x128xf32>
    %4 = tpu.iota {dimensions = array<i32: 1>} : vector<2x128xi32>
    %c1_i32_2 = arith.constant 1 : i32
    %5 = vector.broadcast %c1_i32_2 : i32 to vector<2x128xi32>
    %6 = arith.andi %4, %5 : vector<2x128xi32>
    %c0_i32 = arith.constant 0 : i32
    %7 = vector.broadcast %c0_i32 : i32 to vector<2x128xi32>
    %8 = arith.cmpi eq, %6, %7 : vector<2x128xi32>
    %9 = arith.select %8, %2, %3 : vector<2x128xi1>, vector<2x128xf32>
    %c0_3 = arith.constant 0 : index
    %c0_4 = arith.constant 0 : index
    %10 = vector.load %arg3[%c0_3, %c0_4] : memref<2x128xf32, #tpu.memory_space<vmem>>, vector<2x128xf32>
    %11 = arith.mulf %1, %10 : vector<2x128xf32>
    %c0_5 = arith.constant 0 : index
    %c0_6 = arith.constant 0 : index
    %12 = vector.load %arg4[%c0_5, %c0_6] : memref<2x128xf32, #tpu.memory_space<vmem>>, vector<2x128xf32>
    %13 = arith.mulf %12, %9 : vector<2x128xf32>
    %14 = arith.addf %11, %13 : vector<2x128xf32>
    %c0_7 = arith.constant 0 : index
    %c0_8 = arith.constant 0 : index
    %c0_9 = arith.constant 0 : index
    %15 = vector.load %arg5[%c0_7, %c0_8, %c0_9] : memref<1x2x128xf32, #tpu.memory_space<vmem>>, vector<1x2x128xf32>
    %16 = vector.shape_cast %15 : vector<1x2x128xf32> to vector<2x128xf32>
    %17 = vector.shape_cast %14 : vector<2x128xf32> to vector<1x2x128xf32>
    tpu.vector_store %arg5[%c0_7, %c0_8, %c0_9], %17 {strides = array<i32>} : memref<1x2x128xf32, #tpu.memory_space<vmem>>, vector<1x2x128xf32>,
    return
  }
  func.func @transform_0(%arg0: i32, %arg1: i32) -> (i32, i32, i32) {
    %c0_i32 = arith.constant 0 : i32
    %c0_i32_0 = arith.constant 0 : i32
    return %arg1, %arg0, %c0_i32 : i32, i32, i32
  }
  func.func @transform_1(%arg0: i32, %arg1: i32) -> (i32, i32) {
    %c0_i32 = arith.constant 0 : i32
    %c0_i32_0 = arith.constant 0 : i32
    return %arg0, %c0_i32 : i32, i32
  }
  func.func @transform_2(%arg0: i32, %arg1: i32) -> (i32, i32) {
    %c0_i32 = arith.constant 0 : i32
    %c0_i32_0 = arith.constant 0 : i32
    return %arg0, %c0_i32 : i32, i32
  }
  func.func @transform_3(%arg0: i32, %arg1: i32) -> (i32, i32, i32) {
    %c0_i32 = arith.constant 0 : i32
    %c0_i32_0 = arith.constant 0 : i32
    return %arg1, %arg0, %c0_i32 : i32, i32, i32
  }
}

</mosaic_0001>

<llo_original>
// kernel: tpu_custom_call.1
$region0: #{tpu_custom_call.1}
  #allocation0 [shape = 'u32[]', space=smem, size = 0x4, offset = 0x4, fixed_abs, tag = 'smem constant byte address 0x4 - core index']
  #allocation1 [shape = 'u32[144,128]{1,0:T(1,128)}', space=vmem, size = 0x12000, scoped, tag = 'internal scratch']
  %s0 = inlined_call_operand.hbm [shape: f32[2,2,128], index: 0, kind: input, shape index: {}]
  %s1 = inlined_call_operand.vmem [shape: f32[2,128], index: 1, kind: input, shape index: {}]
  %s2 = inlined_call_operand.vmem [shape: f32[2,128], index: 2, kind: input, shape index: {}]
  %s3 = inlined_call_operand.hbm [shape: f32[2,2,128], index: 3, kind: output, shape index: {}]
  %s4 = sld [smem:[#allocation0]]
  $region49: #{tpu_custom_call.1} parent=0
    _
  %s6 = ssub.s32 1, %s4
  %s7 = scalar_select 0, %s6, %s4
  $region1: #{tpu_custom_call.1} parent=0
    #allocation2 [shape = 'u8[2048]{0}', space=vmem, size = 0x800, scoped, tag = 'input window, operand 0']
    #allocation3 [shape = 's32[2]{0}', space=sflag, size = 0x8, scoped, tag = 'scoped memory for tpu_custom_call.1']
    #allocation4 [shape = 's32[2]{0}', space=sflag, size = 0x8, scoped, tag = 'scoped memory for tpu_custom_call.1']
    #allocation5 [shape = 'u8[2048]{0}', space=vmem, size = 0x800, scoped, tag = 'output window, operand 0']
    %8 = vsyncpa [#allocation3], 0
    %s9 = scalar_lea.sflag [#allocation3], 1
    %10 = vsyncpa %s9, 0
    %11 = vsyncpa [#allocation4], 0
    %s12 = scalar_lea.sflag [#allocation4], 1
    %13 = vsyncpa %s12, 0
    loop: start=0, step=1, limit=4
    $region2: #{tpu_custom_call.1} parent=1 // loop_pre_header
      _
    $region3: #{tpu_custom_call.1} parent=1 // loop_header
      %s15 = sphi 0, %s19
      %p16 = scmp.ge.s32.totalorder %s15, 4
      %s22 = sphi 0, %s34
      %s23 = sphi 0, %s30
      %s24 = sphi 0, %s22
      %s25 = sphi 0, %s23
      %s26 = sphi 0, %s24
      %s27 = sphi 0, %s25
      %s39 = sphi 0, %s41
      %s42 = sphi 0, %s39
      %s43 = sphi 0, %s42
      %s59 = sphi 0, %s43
      %s65 = sphi 0, %s67
      %s68 = sphi 0, %s65
      %s69 = sphi 0, %s68
      %s85 = sphi 0, %s69
      %s91 = sphi 0, %s93
      %s94 = sphi 0, %s91
      %s95 = sphi 0, %s94
      %s111 = sphi 0, %s95
      %s119 = sphi 0, %s121
      %s122 = sphi 0, %s119
      %s123 = sphi 0, %s122
      %s139 = sphi 0, %s123
    $region4: #{tpu_custom_call.1} parent=1 // loop_header_branch
      %18 = sbr.rel (%p16) target = $region8
    $region5: #{tpu_custom_call.1} parent=1 // loop_body
      %s20 = ssub.s32 %s15, 1
      %s21 = ssub.s32 %s15, 2
      %s28 = sadd.s32 1, %s23
      %p29 = scmp.ge.s32.totalorder %s28, 2
      %s30 = scalar_select %p29, 0, %s28
      %s31 = sadd.s32 1, %s22
      %s32 = scalar_select %p29, %s31, %s22
      %p33 = scmp.ge.s32.totalorder %s32, 1
      %s34 = scalar_select %p33, 0, %s32
      %s35 = ssub.s32 %s23, %s30
      %s36 = ssub.s32 %s22, %s34
      %s37 = sor.u32 %s35, %s36
      %p38 = scmp.eq.s32.totalorder %s37, 0
      %s40 = sadd.s32 %s39, 1
      %s41 = scalar_select %p38, %s39, %s40
      %p44 = pneg %p38
      %p45 = scmp.eq.s32.totalorder %s15, 1
      %p46 = por %p44, %p45
      %p47 = scmp.ne.s32.totalorder %s39, %s42
      %p48 = scmp.eq.s32.totalorder %s15, 0
      %p49 = por %p47, %p48
      %p50 = scmp.ne.s32.totalorder %s39, %s42
      %p51 = scmp.eq.s32.totalorder %s20, 1
      %p52 = por %p50, %p51
      %p53 = scmp.ne.s32.totalorder %s42, %s43
      %p54 = scmp.eq.s32.totalorder %s20, 0
      %p55 = por %p53, %p54
      %p56 = scmp.ne.s32.totalorder %s42, %s43
      %p57 = scmp.eq.s32.totalorder %s21, 1
      %p58 = por %p56, %p57
      %p60 = scmp.ne.s32.totalorder %s43, %s59
      %p61 = scmp.eq.s32.totalorder %s21, 0
      %p62 = por %p60, %p61
      %s63 = ssub.s32 %s22, %s34
      %p64 = scmp.eq.s32.totalorder %s63, 0
      %s66 = sadd.s32 %s65, 1
      %s67 = scalar_select %p64, %s65, %s66
      %p70 = pneg %p64
      %p71 = scmp.eq.s32.totalorder %s15, 1
      %p72 = por %p70, %p71
      %p73 = scmp.ne.s32.totalorder %s65, %s68
      %p74 = scmp.eq.s32.totalorder %s15, 0
      %p75 = por %p73, %p74
      %p76 = scmp.ne.s32.totalorder %s65, %s68
      %p77 = scmp.eq.s32.totalorder %s20, 1
      %p78 = por %p76, %p77
      %p79 = scmp.ne.s32.totalorder %s68, %s69
      %p80 = scmp.eq.s32.totalorder %s20, 0
      %p81 = por %p79, %p80
      %p82 = scmp.ne.s32.totalorder %s68, %s69
      %p83 = scmp.eq.s32.totalorder %s21, 1
      %p84 = por %p82, %p83
      %p86 = scmp.ne.s32.totalorder %s69, %s85
      %p87 = scmp.eq.s32.totalorder %s21, 0
      %p88 = por %p86, %p87
      %s89 = ssub.s32 %s22, %s34
      %p90 = scmp.eq.s32.totalorder %s89, 0
      %s92 = sadd.s32 %s91, 1
      %s93 = scalar_select %p90, %s91, %s92
      %p96 = pneg %p90
      %p97 = scmp.eq.s32.totalorder %s15, 1
      %p98 = por %p96, %p97
      %p99 = scmp.ne.s32.totalorder %s91, %s94
      %p100 = scmp.eq.s32.totalorder %s15, 0
      %p101 = por %p99, %p100
      %p102 = scmp.ne.s32.totalorder %s91, %s94
      %p103 = scmp.eq.s32.totalorder %s20, 1
      %p104 = por %p102, %p103
      %p105 = scmp.ne.s32.totalorder %s94, %s95
      %p106 = scmp.eq.s32.totalorder %s20, 0
      %p107 = por %p105, %p106
      %p108 = scmp.ne.s32.totalorder %s94, %s95
      %p109 = scmp.eq.s32.totalorder %s21, 1
      %p110 = por %p108, %p109
      %p112 = scmp.ne.s32.totalorder %s95, %s111
      %p113 = scmp.eq.s32.totalorder %s21, 0
      %p114 = por %p112, %p113
      %s115 = ssub.s32 %s23, %s30
      %s116 = ssub.s32 %s22, %s34
      %s117 = sor.u32 %s115, %s116
      %p118 = scmp.eq.s32.totalorder %s117, 0
      %s120 = sadd.s32 %s119, 1
      %s121 = scalar_select %p118, %s119, %s120
      %p124 = pneg %p118
      %p125 = scmp.eq.s32.totalorder %s15, 1
      %p126 = por %p124, %p125
      %p127 = scmp.ne.s32.totalorder %s119, %s122
      %p128 = scmp.eq.s32.totalorder %s15, 0
      %p129 = por %p127, %p128
      %p130 = scmp.ne.s32.totalorder %s119, %s122
      %p131 = scmp.eq.s32.totalorder %s20, 1
      %p132 = por %p130, %p131
      %p133 = scmp.ne.s32.totalorder %s122, %s123
      %p134 = scmp.eq.s32.totalorder %s20, 0
      %p135 = por %p133, %p134
      %p136 = scmp.ne.s32.totalorder %s122, %s123
      %p137 = scmp.eq.s32.totalorder %s21, 1
      %p138 = por %p136, %p137
      %p140 = scmp.ne.s32.totalorder %s123, %s139
      %p141 = scmp.eq.s32.totalorder %s21, 0
      %p142 = por %p140, %p141
      %p143 = scmp.le.s32.totalorder 1, %s15
      %p144 = scmp.lt.s32.totalorder %s15, 3
      %p145 = pnand %p143, %p144
      %p146 = pneg %p145
      // Predicated region
      $region9: #{tpu_custom_call.1} parent=5 // pred_check
        _
      $region10: #{tpu_custom_call.1} parent=5 // pred_check_branch
        %148 = sbr.rel (%p145) target = $region12
      $region11: #{tpu_custom_call.1} parent=5 // pred_region
        %s149 = ssub.s32 %s15, 1
        // Predicated region
        $region13: #{tpu_custom_call.1} parent=11 // pred_check
          %p150 = pneg %p81
        $region14: #{tpu_custom_call.1} parent=11 // pred_check_branch
          %152 = sbr.rel (%p150) target = $region16
        $region15: #{tpu_custom_call.1} parent=11 // pred_region
          %p153 = scmp.lt.s32.totalorder %s24, 0
          %s154 = scalar_select %p153, %s24, 0
          %s155 = smul.addr %s154, 2
          %s156 = scalar_lea.vmem %s1, %s155
        $region16: #{tpu_custom_call.1} parent=11 // pred_fallthru
          _
        // Predicated region
        $region17: #{tpu_custom_call.1} parent=11 // pred_check
          %p157 = pneg %p107
        $region18: #{tpu_custom_call.1} parent=11 // pred_check_branch
          %159 = sbr.rel (%p157) target = $region20
        $region19: #{tpu_custom_call.1} parent=11 // pred_region
          %p160 = scmp.lt.s32.totalorder %s24, 0
          %s161 = scalar_select %p160, %s24, 0
          %s162 = smul.addr %s161, 2
          %s163 = scalar_lea.vmem %s2, %s162
        $region20: #{tpu_custom_call.1} parent=11 // pred_fallthru
          _
      $region12: #{tpu_custom_call.1} parent=5 // pred_fallthru
        _
      %p164 = scmp.lt.s32.totalorder %s15, 2
      // Predicated region
      $region21: #{tpu_custom_call.1} parent=5 // pred_check
        %p165 = pneg %p164
      $region22: #{tpu_custom_call.1} parent=5 // pred_check_branch
        %167 = sbr.rel (%p165) target = $region24
      $region23: #{tpu_custom_call.1} parent=5 // pred_region
        // Predicated region
        $region25: #{tpu_custom_call.1} parent=23 // pred_check
          %p168 = pneg %p49
        $region26: #{tpu_custom_call.1} parent=23 // pred_check_branch
          %170 = sbr.rel (%p168) target = $region28
        $region27: #{tpu_custom_call.1} parent=23 // pred_region
          %s171 = sand.u32 %s39, 1
          %s172 = scalar_lea.sflag [#allocation3], %s171
          %s173 = sand.u32 %s39, 1
          %s174 = smul.addr %s173, 2
          %s175 = scalar_lea.vmem [#allocation2], %s174
          %s177 = ssub.s32 32, 32
          %178 = vsyncadd %s172, %s177
          %s179 = sadd.s32 %s22, %s23
          %s180 = smul.addr %s179, 32
          %s181 = scalar_lea.hbm %s0, %s180
          %s183 = sshll.u32 %s175, 4
          %s184 = int_to_ptr.vmem [resolvable:$true] %s183
          %186 = dma.hbm_to_vmem [thread:$0]  %s181, 32, %s184, %s172
        $region28: #{tpu_custom_call.1} parent=23 // pred_fallthru
          _
      $region24: #{tpu_custom_call.1} parent=5 // pred_fallthru
        _
      %p187 = scmp.le.s32.totalorder 1, %s15
      %p188 = scmp.lt.s32.totalorder %s15, 3
      %p189 = pnand %p187, %p188
      %p190 = pneg %p189
      // Predicated region
      $region29: #{tpu_custom_call.1} parent=5 // pred_check
        _
      $region30: #{tpu_custom_call.1} parent=5 // pred_check_branch
        %192 = sbr.rel (%p189) target = $region32
      $region31: #{tpu_custom_call.1} parent=5 // pred_region
        %s193 = ssub.s32 %s15, 1
        %s194 = sand.u32 %s42, 1
        %s195 = scalar_lea.sflag [#allocation3], %s194
        %s196 = sand.u32 %s42, 1
        %s197 = smul.addr %s196, 2
        %s198 = scalar_lea.vmem [#allocation2], %s197
        // Predicated region
        $region33: #{tpu_custom_call.1} parent=31 // pred_check
          %p199 = pneg %p55
        $region34: #{tpu_custom_call.1} parent=31 // pred_check_branch
          %201 = sbr.rel (%p199) target = $region36
        $region35: #{tpu_custom_call.1} parent=31 // pred_region
          %202 = dma.done %s195, 32
        $region36: #{tpu_custom_call.1} parent=31 // pred_fallthru
          _
        %s203 = sand.u32 %s42, 1
        %s204 = scalar_lea.sflag [#allocation3], %s203
        %s205 = sand.u32 %s42, 1
        %s206 = smul.addr %s205, 2
        %s207 = scalar_lea.vmem [#allocation2], %s206
        %p208 = pneg %p55
        %p209 = pneg %p52
        %p210 = scmp.lt.s32.totalorder %s24, 0
        %s211 = scalar_select %p210, %s24, 0
        %s212 = smul.addr %s211, 2
        %s213 = scalar_lea.vmem %s1, %s212
        %p214 = pneg %p81
        %p215 = pneg %p78
        %p216 = scmp.lt.s32.totalorder %s24, 0
        %s217 = scalar_select %p216, %s24, 0
        %s218 = smul.addr %s217, 2
        %s219 = scalar_lea.vmem %s2, %s218
        %p220 = pneg %p107
        %p221 = pneg %p104
        %p222 = pneg %p135
        %p223 = pneg %p132
        %s224 = sand.u32 %s122, 1
        %s225 = scalar_lea.sflag [#allocation4], %s224
        %s226 = sand.u32 %s122, 1
        %s227 = smul.addr %s226, 2
        %s228 = scalar_lea.vmem [#allocation5], %s227
        %p229 = scmp.lt.s32.totalorder %s24, 0
        %s230 = scalar_select %p229, %s24, 0
        %s231 = smul.addr %s230, 2
        %s232 = scalar_lea.vmem %s1, %s231
        %p233 = scmp.lt.s32.totalorder %s24, 0
        %s234 = scalar_select %p233, %s24, 0
        %s235 = smul.addr %s234, 2
        %s236 = scalar_lea.vmem %s2, %s235
        %v237 = vld [vmem:[%s198] sm:$0x3]
        %238 = vrot.lane.b32.xlu0 %v237, 127
        %v239 = vpop.permute.xlu0 %238
        %240 = vrot.lane.b32.xlu0 %v237, 1
        %v241 = vpop.permute.xlu0 %240
        %v242 = vlaneseq
        %v243 = vand.u32 %v242, 127
        %v244 = vand.u32 %v243, 1
        %vm245 = vcmp.eq.s32.totalorder %v244, 0
        %v246 = vsel %vm245, %v239, %v241
        %v247 = vld [vmem:[%s232] sm:$0x3]
        %v248 = vmul.f32 %v237, %v247
        %v249 = vld [vmem:[%s236] sm:$0x3]
        %v250 = vmul.f32 %v249, %v246
        %v251 = vadd.f32 %v248, %v250
        %252 = vst [vmem:[%s228] sm:$0x3] %v251
        %s253 = sand.u32 %s122, 1
        %s254 = scalar_lea.sflag [#allocation4], %s253
        %s255 = sand.u32 %s122, 1
        %s256 = smul.addr %s255, 2
        %s257 = scalar_lea.vmem [#allocation5], %s256
        // Predicated region
        $region37: #{tpu_custom_call.1} parent=31 // pred_check
          %p258 = pneg %p132
        $region38: #{tpu_custom_call.1} parent=31 // pred_check_branch
          %260 = sbr.rel (%p258) target = $region40
        $region39: #{tpu_custom_call.1} parent=31 // pred_region
          %s262 = ssub.s32 32, 32
          %263 = vsyncadd %s254, %s262
          %s264 = sadd.s32 %s24, %s25
          %s265 = smul.addr %s264, 32
          %s266 = scalar_lea.hbm %s3, %s265
          %s268 = sshll.u32 %s257, 4
          %s269 = int_to_ptr.vmem [resolvable:$true] %s268
          %271 = dma.vmem_to_hbm [thread:$0]  %s269, 32, %s266, %s254
        $region40: #{tpu_custom_call.1} parent=31 // pred_fallthru
          _
      $region32: #{tpu_custom_call.1} parent=5 // pred_fallthru
        _
      %p272 = scmp.le.s32.totalorder 2, %s15
      // Predicated region
      $region41: #{tpu_custom_call.1} parent=5 // pred_check
        %p273 = pneg %p272
      $region42: #{tpu_custom_call.1} parent=5 // pred_check_branch
        %275 = sbr.rel (%p273) target = $region44
      $region43: #{tpu_custom_call.1} parent=5 // pred_region
        %s276 = ssub.s32 %s15, 2
        // Predicated region
        $region45: #{tpu_custom_call.1} parent=43 // pred_check
          %p277 = pneg %p138
        $region46: #{tpu_custom_call.1} parent=43 // pred_check_branch
          %279 = sbr.rel (%p277) target = $region48
        $region47: #{tpu_custom_call.1} parent=43 // pred_region
          %s280 = sand.u32 %s123, 1
          %s281 = scalar_lea.sflag [#allocation4], %s280
          %s282 = sand.u32 %s123, 1
          %s283 = smul.addr %s282, 2
          %s284 = scalar_lea.vmem [#allocation5], %s283
          %285 = dma.done %s281, 32
        $region48: #{tpu_custom_call.1} parent=43 // pred_fallthru
          _
      $region44: #{tpu_custom_call.1} parent=5 // pred_fallthru
        _
    $region6: #{tpu_custom_call.1} parent=1 // loop_footer
      %s19 = sadd.s32 1, %s15
    $region7: #{tpu_custom_call.1} parent=1 // loop_footer_branch
      %14 = sbr.rel target = $region3
    $region8: #{tpu_custom_call.1} parent=1 // loop_exit
      _
    %286 = vsyncpa [#allocation3], 1
    %s287 = scalar_lea.sflag [#allocation3], 1
    %288 = vsyncpa %s287, 1
    %289 = vsyncpa [#allocation4], 1
    %s290 = scalar_lea.sflag [#allocation4], 1
    %291 = vsyncpa %s290, 1

</llo_original>
